<compile_context>
chip_gen: v7x
topology: tpu7x:2x2x1
jax: 0.10.0
libtpu: 0.0.40
codegen_flags: <defaults>
</compile_context>

<pallas_src>
import functools

import jax
import jax.numpy as jnp
from jax import lax
from jax.experimental import pallas as pl
from jax.experimental.pallas import tpu as pltpu


def _pam_kernel(x_ref, wqk_ref, bqk_ref, gamma_ref, out_ref, *, cq, n_valid):
    # x_ref:    (Bt, C, Np)   input features (f32 or bf16), Np lane-dense (mult of 128)
    # wqk_ref:  (2*Cq, C)     fused query/key 1x1-conv weight (same dtype as x)
    # bqk_ref:  (2*Cq, 1)     fused bias (f32)
    # gamma_ref:(1,) SMEM     residual scale (f32 scalar)
    # out_ref:  (Bt, C, Np)   f32 output
    x = x_ref[...]                                   # (Bt, C, Np)
    bt = x.shape[0]
    x_f32 = x.astype(jnp.float32)

    # Fused q/k 1x1 conv as one batched matmul: (Bt,2Cq,C) @ (Bt,C,Np) -> (Bt,2Cq,Np)
    w = jnp.broadcast_to(wqk_ref[...][None], (bt,) + wqk_ref.shape)
    qk = lax.dot_general(
        w, x,
        dimension_numbers=(((2,), (1,)), ((0,), (0,))),
        preferred_element_type=jnp.float32,
    )
    qk = (qk + bqk_ref[...][None, :, :]).astype(x.dtype)
    q = qk[:, :cq, :]                                # (Bt, Cq, Np)
    k = qk[:, cq:, :]                                # (Bt, Cq, Np)

    # energy[b,n,m] = sum_c q[b,c,n] * k[b,c,m]   (no explicit transpose)
    energy = lax.dot_general(
        q, k,
        dimension_numbers=(((1,), (1,)), ((0,), (0,))),
        preferred_element_type=jnp.float32,
    )                                                # (Bt, Np, Np)

    # Mask padded key columns before softmax (static shapes -> static branch).
    np_total = energy.shape[-1]
    if n_valid < np_total:
        col = lax.broadcasted_iota(jnp.int32, (1, 1, np_total), 2)
        energy = jnp.where(col < n_valid, energy, -1e30)

    # Numerically-stable row softmax; denominator reciprocal on the EUP.
    m = jnp.max(energy, axis=-1, keepdims=True)
    p = jnp.exp(energy - m)
    attn = p * pl.reciprocal(jnp.sum(p, axis=-1, keepdims=True), approx=True)

    # out[b,c,m] = sum_n x[b,c,n] * attn[b,m,n]  ( == value @ attn^T, no transpose)
    out = lax.dot_general(
        x, attn.astype(x.dtype),
        dimension_numbers=(((2,), (2,)), ((0,), (0,))),
        preferred_element_type=jnp.float32,
    )                                                # (Bt, C, Np)

    out_ref[...] = (gamma_ref[0] * out + x_f32).astype(out_ref.dtype)


def _choose_bt(B, C, Np, vmem_budget_bytes=24 * 1024 * 1024):
    """Largest batch block that keeps the NxN softmax intermediates in budget
    and (when B >= 2) keeps at least two grid steps for the v7x dual cores."""
    per_b = (3 * Np * Np + 8 * C * Np) * 4           # energy/p/attn + x/qk/out (f32)
    bt = max(1, min(B, vmem_budget_bytes // max(per_b, 1)))
    if B >= 2:
        bt = max(1, min(bt, B // 2))
    while B % bt != 0:
        bt -= 1
    return bt


def pam_forward(x, wq, bq, wk, bk, gamma, *, use_bf16=False):
    """x: (B, C, H, W) float32.  Returns (B, C, H, W) float32."""
    B, C, H, W = x.shape
    N = H * W
    Np = ((N + 127) // 128) * 128                    # lane-dense spatial dim
    Cq = wq.shape[0]

    x_flat = x.reshape(B, C, N).astype(jnp.float32)
    if Np != N:
        x_flat = jnp.pad(x_flat, ((0, 0), (0, 0), (0, Np - N)))

    # Fuse query/key projections into one weight/bias.
    wqk = jnp.concatenate([wq, wk], axis=0)                          # (2Cq, C)
    bqk = jnp.concatenate([bq, bk], axis=0).reshape(2 * Cq, 1)       # (2Cq, 1) f32
    gamma1 = jnp.asarray(gamma, jnp.float32).reshape(1)              # SMEM scalar

    compute_dtype = jnp.bfloat16 if use_bf16 else jnp.float32
    x_in = x_flat.astype(compute_dtype)
    wqk_in = wqk.astype(compute_dtype)

    Bt = _choose_bt(B, C, Np)
    grid = (B // Bt,)

    cost = pl.CostEstimate(
        flops=int(B * (2 * (2 * Cq) * C * Np + 2 * Cq * Np * Np + 2 * C * Np * Np)),
        transcendentals=int(B * Np * Np),
        bytes_accessed=int(2 * B * C * Np * 4 + 2 * Cq * C * 4),
    )

    kernel = functools.partial(_pam_kernel, cq=Cq, n_valid=N)

    out_flat = pl.pallas_call(
        kernel,
        out_shape=jax.ShapeDtypeStruct((B, C, Np), jnp.float32),
        grid_spec=pltpu.PrefetchScalarGridSpec(
            num_scalar_prefetch=0,
            grid=grid,
            in_specs=[
                pl.BlockSpec((Bt, C, Np), lambda b: (b, 0, 0)),        # x (lane-dense)
                pl.BlockSpec((2 * Cq, C), lambda b: (0, 0)),           # fused Wqk
                pl.BlockSpec((2 * Cq, 1), lambda b: (0, 0)),           # fused bias
                pl.BlockSpec(memory_space=pltpu.MemorySpace.SMEM),     # gamma scalar
            ],
            out_specs=pl.BlockSpec((Bt, C, Np), lambda b: (b, 0, 0)),
        ),
        compiler_params=pltpu.CompilerParams(
            dimension_semantics=("parallel",),
            vmem_limit_bytes=48 * 1024 * 1024,
        ),
        cost_estimate=cost,
    )(x_in, wqk_in, bqk, gamma1)

    return out_flat[..., :N].reshape(B, C, H, W)


def pam_reference(x, wq, bq, wk, bk, gamma):
    """Pure-JAX reference mirroring the PyTorch PAM_Module forward exactly."""
    B, C, H, W = x.shape
    N = H * W
    xf = x.reshape(B, C, N)
    q = jnp.einsum("oc,bcn->bon", wq, xf) + bq[None, :, None]        # (B, Cq, N)
    k = jnp.einsum("oc,bcn->bon", wk, xf) + bk[None, :, None]        # (B, Cq, N)
    energy = jnp.einsum("bon,bom->bnm", q, k)                        # (B, N, N)
    attn = jax.nn.softmax(energy, axis=-1)
    out = jnp.einsum("bcn,bmn->bcm", xf, attn)                       # = value @ attn^T
    out = out.reshape(B, C, H, W)
    return gamma * out + x


if __name__ == "__main__":
    # PAM_Module requires in_dim >= 8 so in_dim // 8 >= 1.
    B, C, H, W = 2, 16, 8, 8          # N = 64 -> padded to 128 lanes inside the kernel
    Cq = C // 8

    key = jax.random.PRNGKey(0)
    kx, kwq, kbq, kwk, kbk, kwv, kbv = jax.random.split(key, 7)

    x = jax.random.normal(kx, (B, C, H, W), dtype=jnp.float32)
    wq = 0.1 * jax.random.normal(kwq, (Cq, C), dtype=jnp.float32)
    bq = 0.1 * jax.random.normal(kbq, (Cq,), dtype=jnp.float32)
    wk = 0.1 * jax.random.normal(kwk, (Cq, C), dtype=jnp.float32)
    bk = 0.1 * jax.random.normal(kbk, (Cq,), dtype=jnp.float32)
    # value_conv params exist in PAM_Module.__init__ but its forward never uses them.
    wv = 0.1 * jax.random.normal(kwv, (C, C), dtype=jnp.float32)     # unused
    bv = 0.1 * jax.random.normal(kbv, (C,), dtype=jnp.float32)       # unused
    # gamma is zero-init in the module; use a nonzero value so the attention path
    # actually contributes to the output.
    gamma = jnp.array([0.5], dtype=jnp.float32)

    ref = pam_reference(x, wq, bq, wk, bk, gamma)

    # f32 path. Tolerance accounts for the EUP approximate reciprocal in the
    # softmax denominator (approx=True); real layout/transpose bugs are O(1).
    out = jax.block_until_ready(pam_forward(x, wq, bq, wk, bk, gamma, use_bf16=False))
    assert out.shape == (B, C, H, W)
    assert jnp.allclose(out, ref, atol=5e-3, rtol=5e-3), "f32 kernel mismatch vs reference"

    # bf16 matmul-operand path (v6e/v7x MXU-friendly); f32 accumulate/softmax/residual.
    out_bf16 = jax.block_until_ready(pam_forward(x, wq, bq, wk, bk, gamma, use_bf16=True))
    assert jnp.allclose(out_bf16, ref, atol=5e-2, rtol=5e-2), "bf16 kernel mismatch vs reference"

    print("KERNEL_OK")
</pallas_src>

<mosaic_0001>
module attributes {stable_mosaic.version = 11 : i64} {
  func.func @_pam_kernel(%arg0: i32, %arg1: memref<1x16x128xf32, #tpu.memory_space<vmem>>, %arg2: memref<4x16xf32, #tpu.memory_space<vmem>>, %arg3: memref<4x1xf32, #tpu.memory_space<vmem>>, %arg4: memref<1xf32, #tpu.memory_space<smem>>, %arg5: memref<1x16x128xf32, #tpu.memory_space<vmem>>) attributes {dimension_semantics = [#tpu.dimension_semantics<parallel>], iteration_bounds = array<i64: 2>, scalar_prefetch = 0 : i64, scratch_operands = 0 : i64, tpu.core_type = #tpu.core_type<tc>, window_params = [{transform_indices = @transform_0, window_bounds = array<i64: 1, 16, 128>}, {pipeline_mode = #tpu.pipeline_mode<synchronous>, transform_indices = @transform_1, window_bounds = array<i64: 4, 16>}, {pipeline_mode = #tpu.pipeline_mode<synchronous>, transform_indices = @transform_2, window_bounds = array<i64: 4, 1>}, {transform_indices = @transform_3, window_bounds = array<i64: 1>}, {transform_indices = @transform_4, window_bounds = array<i64: 1, 16, 128>}]} {
    %c0 = arith.constant 0 : index
    %c0_0 = arith.constant 0 : index
    %c0_1 = arith.constant 0 : index
    %0 = vector.load %arg1[%c0, %c0_0, %c0_1] : memref<1x16x128xf32, #tpu.memory_space<vmem>>, vector<1x16x128xf32>
    %c0_2 = arith.constant 0 : index
    %c0_3 = arith.constant 0 : index
    %1 = vector.load %arg2[%c0_2, %c0_3] : memref<4x16xf32, #tpu.memory_space<vmem>>, vector<4x16xf32>
    %2 = vector.shape_cast %1 : vector<4x16xf32> to vector<1x4x16xf32>
    %cst = arith.constant dense<0.000000e+00> : vector<1x4x128xf32>
    %3 = tpu.matmul %2, %0, %cst {dimension_numbers = #tpu.dot_dimension_numbers<[2], [1], [1], [2], [0, 0, 0, 1, 1, 2], [0], [0]>} : vector<1x4x16xf32>, vector<1x16x128xf32>, vector<1x4x128xf32> -> vector<1x4x128xf32>
    %c0_4 = arith.constant 0 : index
    %c0_5 = arith.constant 0 : index
    %4 = vector.load %arg3[%c0_4, %c0_5] : memref<4x1xf32, #tpu.memory_space<vmem>>, vector<4x1xf32>
    %5 = vector.shape_cast %4 : vector<4x1xf32> to vector<1x4x1xf32>
    %6 = vector.broadcast %5 : vector<1x4x1xf32> to vector<1x4x128xf32>
    %7 = arith.addf %3, %6 : vector<1x4x128xf32>
    %8 = vector.extract_strided_slice %7 {offsets = [0, 0, 0], sizes = [1, 2, 128], strides = [1, 1, 1]} : vector<1x4x128xf32> to vector<1x2x128xf32>
    %9 = vector.extract_strided_slice %7 {offsets = [0, 2, 0], sizes = [1, 2, 128], strides = [1, 1, 1]} : vector<1x4x128xf32> to vector<1x2x128xf32>
    %cst_6 = arith.constant dense<0.000000e+00> : vector<1x128x128xf32>
    %10 = tpu.matmul %8, %9, %cst_6 {dimension_numbers = #tpu.dot_dimension_numbers<[1], [1], [2], [2], [0, 0, 0, 2, 1, 2], [0], [0]>} : vector<1x2x128xf32>, vector<1x2x128xf32>, vector<1x128x128xf32> -> vector<1x128x128xf32>
    %11 = tpu.iota {dimensions = array<i32: 2>} : vector<1x1x128xi32>
    %c64_i32 = arith.constant 64 : i32
    %12 = vector.broadcast %c64_i32 : i32 to vector<1x1x128xi32>
    %13 = arith.cmpi slt, %11, %12 : vector<1x1x128xi32>
    %cst_7 = arith.constant -1.000000e+30 : f32
    %14 = vector.shape_cast %13 : vector<1x1x128xi1> to vector<1x1x128xi1>
    %15 = vector.broadcast %14 : vector<1x1x128xi1> to vector<1x128x128xi1>
    %16 = vector.broadcast %cst_7 : f32 to vector<1x128x128xf32>
    %17 = arith.select %15, %10, %16 : vector<1x128x128xi1>, vector<1x128x128xf32>
    %cst_8 = arith.constant dense<0xFF800000> : vector<1x128xf32>
    %18 = vector.multi_reduction <maximumf>, %17, %cst_8 [2] : vector<1x128x128xf32> to vector<1x128xf32>
    %19 = vector.shape_cast %18 : vector<1x128xf32> to vector<1x128x1xf32>
    %20 = vector.broadcast %19 : vector<1x128x1xf32> to vector<1x128x128xf32>
    %21 = arith.subf %17, %20 : vector<1x128x128xf32>
    %22 = math.exp %21 : vector<1x128x128xf32>
    %cst_9 = arith.constant dense<0.000000e+00> : vector<1x128xf32>
    %23 = vector.multi_reduction <add>, %22, %cst_9 [2] : vector<1x128x128xf32> to vector<1x128xf32>
    %24 = vector.shape_cast %23 : vector<1x128xf32> to vector<1x128x1xf32>
    %25 = tpu.reciprocal %24 {approx = true} : vector<1x128x1xf32> -> vector<1x128x1xf32>
    %26 = vector.broadcast %25 : vector<1x128x1xf32> to vector<1x128x128xf32>
    %27 = arith.mulf %22, %26 : vector<1x128x128xf32>
    %cst_10 = arith.constant dense<0.000000e+00> : vector<1x16x128xf32>
    %28 = tpu.matmul %0, %27, %cst_10 {dimension_numbers = #tpu.dot_dimension_numbers<[2], [2], [1], [1], [0, 0, 0, 1, 1, 1], [0], [0]>} : vector<1x16x128xf32>, vector<1x128x128xf32>, vector<1x16x128xf32> -> vector<1x16x128xf32>
    %c0_11 = arith.constant 0 : index
    %29 = memref.load %arg4[%c0_11] : memref<1xf32, #tpu.memory_space<smem>>
    %30 = vector.broadcast %29 : f32 to vector<1x16x128xf32>
    %31 = arith.mulf %30, %28 : vector<1x16x128xf32>
    %32 = arith.addf %31, %0 : vector<1x16x128xf32>
    %c0_12 = arith.constant 0 : index
    %c0_13 = arith.constant 0 : index
    %c0_14 = arith.constant 0 : index
    %33 = vector.load %arg5[%c0_12, %c0_13, %c0_14] : memref<1x16x128xf32, #tpu.memory_space<vmem>>, vector<1x16x128xf32>
    tpu.vector_store %arg5[%c0_12, %c0_13, %c0_14], %32 {strides = array<i32>} : memref<1x16x128xf32, #tpu.memory_space<vmem>>, vector<1x16x128xf32>,
    return
  }
  func.func @transform_0(%arg0: i32) -> (i32, i32, i32) {
    %c0_i32 = arith.constant 0 : i32
    %c0_i32_0 = arith.constant 0 : i32
    %c0_i32_1 = arith.constant 0 : i32
    return %arg0, %c0_i32, %c0_i32_0 : i32, i32, i32
  }
  func.func @transform_1(%arg0: i32) -> (i32, i32) {
    %c0_i32 = arith.constant 0 : i32
    %c0_i32_0 = arith.constant 0 : i32
    %c0_i32_1 = arith.constant 0 : i32
    return %c0_i32, %c0_i32_0 : i32, i32
  }
  func.func @transform_2(%arg0: i32) -> (i32, i32) {
    %c0_i32 = arith.constant 0 : i32
    %c0_i32_0 = arith.constant 0 : i32
    %c0_i32_1 = arith.constant 0 : i32
    return %c0_i32, %c0_i32_0 : i32, i32
  }
  func.func @transform_3(%arg0: i32) -> i32 {
    %c0_i32 = arith.constant 0 : i32
    %c0_i32_0 = arith.constant 0 : i32
    return %c0_i32 : i32
  }
  func.func @transform_4(%arg0: i32) -> (i32, i32, i32) {
    %c0_i32 = arith.constant 0 : i32
    %c0_i32_0 = arith.constant 0 : i32
    %c0_i32_1 = arith.constant 0 : i32
    return %arg0, %c0_i32, %c0_i32_0 : i32, i32, i32
  }
}

</mosaic_0001>

<llo_original>
// kernel: tpu_custom_call.1
$region0: #{tpu_custom_call.1}
  #allocation0 [shape = 'u32[]', space=smem, size = 0x4, offset = 0x4, fixed_abs, tag = 'smem constant byte address 0x4 - core index']
  #allocation1 [shape = 'u32[144,128]{1,0:T(1,128)}', space=vmem, size = 0x12000, scoped, tag = 'internal scratch']
  #allocation2 [shape = 'f32[1]{0:T(128)S(6)}', space=smem, size = 0x200, scoped, tag = 'scoped memory for tpu_custom_call.1']
  %s0 = inlined_call_operand.hbm [shape: f32[2,16,128], index: 0, kind: input, shape index: {}]
  %s1 = inlined_call_operand.vmem [shape: f32[4,16], index: 1, kind: input, shape index: {}]
  %s2 = inlined_call_operand.vmem [shape: f32[4,1], index: 2, kind: input, shape index: {}]
  %s3 = inlined_call_operand.<no memory space> [shape: f32[1], index: 3, kind: input, shape index: {}]
  %s4 = inlined_call_operand.hbm [shape: f32[2,16,128], index: 4, kind: output, shape index: {}]
  %s5 = sld [smem:[#allocation0]]
  $region53: #{tpu_custom_call.1} parent=0
    _
  %s7 = ssub.s32 1, %s5
  %s8 = scalar_select 0, %s7, %s5
  %9 = sst [smem:[#allocation2]] %s3
  $region1: #{tpu_custom_call.1} parent=0
    #allocation3 [shape = 'u8[16384]{0}', space=vmem, size = 0x4000, scoped, tag = 'input window, operand 0']
    #allocation4 [shape = 's32[2]{0}', space=sflag, size = 0x8, scoped, tag = 'scoped memory for tpu_custom_call.1']
    #allocation5 [shape = 's32[2]{0}', space=sflag, size = 0x8, scoped, tag = 'scoped memory for tpu_custom_call.1']
    #allocation6 [shape = 'u8[16384]{0}', space=vmem, size = 0x4000, scoped, tag = 'output window, operand 0']
    %10 = vsyncpa [#allocation4], 0
    %s11 = scalar_lea.sflag [#allocation4], 1
    %12 = vsyncpa %s11, 0
    %13 = vsyncpa [#allocation5], 0
    %s14 = scalar_lea.sflag [#allocation5], 1
    %15 = vsyncpa %s14, 0
    loop: start=0, step=1, limit=4
    $region2: #{tpu_custom_call.1} parent=1 // loop_pre_header
      _
    $region3: #{tpu_custom_call.1} parent=1 // loop_header
      %s17 = sphi 0, %s21
      %p18 = scmp.ge.s32.totalorder %s17, 4
      %s27 = sphi 0, %s29
      %s30 = sphi 0, %s27
      %s31 = sphi 0, %s30
      %s47 = sphi 0, %s31
      %s51 = sphi 0, %s51
      %s53 = sphi 0, %s51
      %s54 = sphi 0, %s53
      %s68 = sphi 0, %s54
      %s72 = sphi 0, %s72
      %s74 = sphi 0, %s72
      %s75 = sphi 0, %s74
      %s89 = sphi 0, %s75
      %s93 = sphi 0, %s93
      %s95 = sphi 0, %s93
      %s96 = sphi 0, %s95
      %s110 = sphi 0, %s96
      %s116 = sphi 0, %s118
      %s119 = sphi 0, %s116
      %s120 = sphi 0, %s119
      %s136 = sphi 0, %s120
    $region4: #{tpu_custom_call.1} parent=1 // loop_header_branch
      %20 = sbr.rel (%p18) target = $region8
    $region5: #{tpu_custom_call.1} parent=1 // loop_body
      %s22 = ssub.s32 %s17, 1
      %s23 = ssub.s32 %s17, 2
      %s24 = sadd.s32 %s17, 1
      %s25 = ssub.s32 %s17, %s24
      %p26 = scmp.eq.s32.totalorder %s25, 0
      %s28 = sadd.s32 %s27, 1
      %s29 = scalar_select %p26, %s27, %s28
      %p32 = pneg %p26
      %p33 = scmp.eq.s32.totalorder %s17, 1
      %p34 = por %p32, %p33
      %p35 = scmp.ne.s32.totalorder %s27, %s30
      %p36 = scmp.eq.s32.totalorder %s17, 0
      %p37 = por %p35, %p36
      %p38 = scmp.ne.s32.totalorder %s27, %s30
      %p39 = scmp.eq.s32.totalorder %s22, 1
      %p40 = por %p38, %p39
      %p41 = scmp.ne.s32.totalorder %s30, %s31
      %p42 = scmp.eq.s32.totalorder %s22, 0
      %p43 = por %p41, %p42
      %p44 = scmp.ne.s32.totalorder %s30, %s31
      %p45 = scmp.eq.s32.totalorder %s23, 1
      %p46 = por %p44, %p45
      %p48 = scmp.ne.s32.totalorder %s31, %s47
      %p49 = scmp.eq.s32.totalorder %s23, 0
      %p50 = por %p48, %p49
      %s52 = sadd.s32 %s51, 1
      %p55 = scmp.eq.s32.totalorder %s17, 1
      %p56 = scmp.ne.s32.totalorder %s51, %s53
      %p57 = scmp.eq.s32.totalorder %s17, 0
      %p58 = por %p56, %p57
      %p59 = scmp.ne.s32.totalorder %s51, %s53
      %p60 = scmp.eq.s32.totalorder %s22, 1
      %p61 = por %p59, %p60
      %p62 = scmp.ne.s32.totalorder %s53, %s54
      %p63 = scmp.eq.s32.totalorder %s22, 0
      %p64 = por %p62, %p63
      %p65 = scmp.ne.s32.totalorder %s53, %s54
      %p66 = scmp.eq.s32.totalorder %s23, 1
      %p67 = por %p65, %p66
      %p69 = scmp.ne.s32.totalorder %s54, %s68
      %p70 = scmp.eq.s32.totalorder %s23, 0
      %p71 = por %p69, %p70
      %s73 = sadd.s32 %s72, 1
      %p76 = scmp.eq.s32.totalorder %s17, 1
      %p77 = scmp.ne.s32.totalorder %s72, %s74
      %p78 = scmp.eq.s32.totalorder %s17, 0
      %p79 = por %p77, %p78
      %p80 = scmp.ne.s32.totalorder %s72, %s74
      %p81 = scmp.eq.s32.totalorder %s22, 1
      %p82 = por %p80, %p81
      %p83 = scmp.ne.s32.totalorder %s74, %s75
      %p84 = scmp.eq.s32.totalorder %s22, 0
      %p85 = por %p83, %p84
      %p86 = scmp.ne.s32.totalorder %s74, %s75
      %p87 = scmp.eq.s32.totalorder %s23, 1
      %p88 = por %p86, %p87
      %p90 = scmp.ne.s32.totalorder %s75, %s89
      %p91 = scmp.eq.s32.totalorder %s23, 0
      %p92 = por %p90, %p91
      %s94 = sadd.s32 %s93, 1
      %p97 = scmp.eq.s32.totalorder %s17, 1
      %p98 = scmp.ne.s32.totalorder %s93, %s95
      %p99 = scmp.eq.s32.totalorder %s17, 0
      %p100 = por %p98, %p99
      %p101 = scmp.ne.s32.totalorder %s93, %s95
      %p102 = scmp.eq.s32.totalorder %s22, 1
      %p103 = por %p101, %p102
      %p104 = scmp.ne.s32.totalorder %s95, %s96
      %p105 = scmp.eq.s32.totalorder %s22, 0
      %p106 = por %p104, %p105
      %p107 = scmp.ne.s32.totalorder %s95, %s96
      %p108 = scmp.eq.s32.totalorder %s23, 1
      %p109 = por %p107, %p108
      %p111 = scmp.ne.s32.totalorder %s96, %s110
      %p112 = scmp.eq.s32.totalorder %s23, 0
      %p113 = por %p111, %p112
      %s114 = ssub.s32 %s17, %s24
      %p115 = scmp.eq.s32.totalorder %s114, 0
      %s117 = sadd.s32 %s116, 1
      %s118 = scalar_select %p115, %s116, %s117
      %p121 = pneg %p115
      %p122 = scmp.eq.s32.totalorder %s17, 1
      %p123 = por %p121, %p122
      %p124 = scmp.ne.s32.totalorder %s116, %s119
      %p125 = scmp.eq.s32.totalorder %s17, 0
      %p126 = por %p124, %p125
      %p127 = scmp.ne.s32.totalorder %s116, %s119
      %p128 = scmp.eq.s32.totalorder %s22, 1
      %p129 = por %p127, %p128
      %p130 = scmp.ne.s32.totalorder %s119, %s120
      %p131 = scmp.eq.s32.totalorder %s22, 0
      %p132 = por %p130, %p131
      %p133 = scmp.ne.s32.totalorder %s119, %s120
      %p134 = scmp.eq.s32.totalorder %s23, 1
      %p135 = por %p133, %p134
      %p137 = scmp.ne.s32.totalorder %s120, %s136
      %p138 = scmp.eq.s32.totalorder %s23, 0
      %p139 = por %p137, %p138
      %p140 = scmp.le.s32.totalorder 1, %s17
      %p141 = scmp.lt.s32.totalorder %s17, 3
      %p142 = pnand %p140, %p141
      %p143 = pneg %p142
      // Predicated region
      $region9: #{tpu_custom_call.1} parent=5 // pred_check
        _
      $region10: #{tpu_custom_call.1} parent=5 // pred_check_branch
        %145 = sbr.rel (%p142) target = $region12
      $region11: #{tpu_custom_call.1} parent=5 // pred_region
        %s146 = ssub.s32 %s17, 1
        // Predicated region
        $region13: #{tpu_custom_call.1} parent=11 // pred_check
          %p147 = pneg %p64
        $region14: #{tpu_custom_call.1} parent=11 // pred_check_branch
          %149 = sbr.rel (%p147) target = $region16
        $region15: #{tpu_custom_call.1} parent=11 // pred_region
          _
        $region16: #{tpu_custom_call.1} parent=11 // pred_fallthru
          _
        // Predicated region
        $region17: #{tpu_custom_call.1} parent=11 // pred_check
          %p150 = pneg %p85
        $region18: #{tpu_custom_call.1} parent=11 // pred_check_branch
          %152 = sbr.rel (%p150) target = $region20
        $region19: #{tpu_custom_call.1} parent=11 // pred_region
          _
        $region20: #{tpu_custom_call.1} parent=11 // pred_fallthru
          _
        // Predicated region
        $region21: #{tpu_custom_call.1} parent=11 // pred_check
          %p153 = pneg %p106
        $region22: #{tpu_custom_call.1} parent=11 // pred_check_branch
          %155 = sbr.rel (%p153) target = $region24
        $region23: #{tpu_custom_call.1} parent=11 // pred_region
          _
        $region24: #{tpu_custom_call.1} parent=11 // pred_fallthru
          _
      $region12: #{tpu_custom_call.1} parent=5 // pred_fallthru
        _
      %p156 = scmp.lt.s32.totalorder %s17, 2
      // Predicated region
      $region25: #{tpu_custom_call.1} parent=5 // pred_check
        %p157 = pneg %p156
      $region26: #{tpu_custom_call.1} parent=5 // pred_check_branch
        %159 = sbr.rel (%p157) target = $region28
      $region27: #{tpu_custom_call.1} parent=5 // pred_region
        // Predicated region
        $region29: #{tpu_custom_call.1} parent=27 // pred_check
          %p160 = pneg %p37
        $region30: #{tpu_custom_call.1} parent=27 // pred_check_branch
          %162 = sbr.rel (%p160) target = $region32
        $region31: #{tpu_custom_call.1} parent=27 // pred_region
          %s163 = sand.u32 %s27, 1
          %s164 = scalar_lea.sflag [#allocation4], %s163
          %s165 = sand.u32 %s27, 1
          %s166 = smul.addr %s165, 16
          %s167 = scalar_lea.vmem [#allocation3], %s166
          %s169 = ssub.s32 256, 256
          %170 = vsyncadd %s164, %s169
          %s171 = smul.addr %s17, 2
          %s172 = smul.addr %s171, 128
          %s173 = scalar_lea.hbm %s0, %s172
          %s174 = sshll.u32 %s167, 4
          %s175 = int_to_ptr.vmem [resolvable:$true] %s174
          %180 = dma.hbm_to_vmem [thread:$0]  %s173, 256, %s175, %s164, 128, 128, 8
        $region32: #{tpu_custom_call.1} parent=27 // pred_fallthru
          _
      $region28: #{tpu_custom_call.1} parent=5 // pred_fallthru
        _
      %p181 = scmp.le.s32.totalorder 1, %s17
      %p182 = scmp.lt.s32.totalorder %s17, 3
      %p183 = pnand %p181, %p182
      %p184 = pneg %p183
      // Predicated region
      $region33: #{tpu_custom_call.1} parent=5 // pred_check
        _
      $region34: #{tpu_custom_call.1} parent=5 // pred_check_branch
        %186 = sbr.rel (%p183) target = $region36
      $region35: #{tpu_custom_call.1} parent=5 // pred_region
        %s187 = ssub.s32 %s17, 1
        %s188 = sand.u32 %s30, 1
        %s189 = scalar_lea.sflag [#allocation4], %s188
        %s190 = sand.u32 %s30, 1
        %s191 = smul.addr %s190, 16
        %s192 = scalar_lea.vmem [#allocation3], %s191
        // Predicated region
        $region37: #{tpu_custom_call.1} parent=35 // pred_check
          %p193 = pneg %p43
        $region38: #{tpu_custom_call.1} parent=35 // pred_check_branch
          %195 = sbr.rel (%p193) target = $region40
        $region39: #{tpu_custom_call.1} parent=35 // pred_region
          %196 = dma.done %s189, 256
        $region40: #{tpu_custom_call.1} parent=35 // pred_fallthru
          _
        %s197 = sand.u32 %s30, 1
        %s198 = scalar_lea.sflag [#allocation4], %s197
        %s199 = sand.u32 %s30, 1
        %s200 = smul.addr %s199, 16
        %s201 = scalar_lea.vmem [#allocation3], %s200
        %p202 = pneg %p43
        %p203 = pneg %p40
        %p204 = pneg %p64
        %p205 = pneg %p61
        %p206 = pneg %p85
        %p207 = pneg %p82
        %p208 = pneg %p106
        %p209 = pneg %p103
        %p210 = pneg %p132
        %p211 = pneg %p129
        %s212 = sand.u32 %s119, 1
        %s213 = scalar_lea.sflag [#allocation5], %s212
        %s214 = sand.u32 %s119, 1
        %s215 = smul.addr %s214, 16
        %s216 = scalar_lea.vmem [#allocation6], %s215
        %v217 = vld [vmem:[%s192] sm:$0xff]
        %v218 = vld [vmem:[%s192 + $0x8] sm:$0xff]
        %v219 = vld [vmem:[%s1] sm:$0xf]
        %v220 = vld [vmem:[%s2] sm:$0xf]
        %222 = vset.pattern.permute.xlu0 0
        %223 = vperm.xlu0 %222, %v220
        %v224 = vpop.permute.xlu0 %223
        %vm226 = vcmask 130048
        %v228 = vsel %vm226, %v219, 0
        %230 = vmatprep.subr.mxu0 0.0
        %231 = vmatpush1.msra.mxu0 %v217
        %232 = vmatprep.subr.mxu0 0.0
        %233 = vmatpush1.msra.mxu0 %v218
        %234 = vmatprep.subr.mxu0 0.0
        %235 = vmatpush1.msra.mxu0 0.0
        %236 = vmatprep.subr.mxu0 0.0
        %237 = vmatpush1.msra.mxu0 0.0
        %238 = vmatprep.subr.mxu0 0.0
        %239 = vmatpush1.msra.mxu0 0.0
        %240 = vmatprep.subr.mxu0 0.0
        %241 = vmatpush1.msra.mxu0 0.0
        %242 = vmatprep.subr.mxu0 0.0
        %243 = vmatpush1.msra.mxu0 0.0
        %244 = vmatprep.subr.mxu0 0.0
        %245 = vmatpush1.msra.mxu0 0.0
        %246 = vmatprep.subr.mxu0 0.0
        %247 = vmatpush1.msra.mxu0 0.0
        %248 = vmatprep.subr.mxu0 0.0
        %249 = vmatpush1.msra.mxu0 0.0
        %250 = vmatprep.subr.mxu0 0.0
        %251 = vmatpush1.msra.mxu0 0.0
        %252 = vmatprep.subr.mxu0 0.0
        %253 = vmatpush1.msra.mxu0 0.0
        %254 = vmatprep.subr.mxu0 0.0
        %255 = vmatpush1.msra.mxu0 0.0
        %256 = vmatprep.subr.mxu0 0.0
        %257 = vmatpush1.msra.mxu0 0.0
        %258 = vmatprep.subr.mxu0 0.0
        %259 = vmatpush1.msra.mxu0 0.0
        %260 = vmatprep.subr.mxu0 0.0
        %261 = vmatpush1.msra.mxu0 0.0
        %262 = vmatprep.subr.mxu0 0.0
        %263 = vmatpush1.msra.mxu0 0.0
        %264 = vmatprep.subr.mxu0 0.0
        %265 = vmatpush1.msra.mxu0 0.0
        %266 = vmatprep.subr.mxu0 0.0
        %267 = vmatpush1.msra.mxu0 0.0
        %268 = vmatprep.subr.mxu0 0.0
        %269 = vmatpush1.msra.mxu0 0.0
        %270 = vmatprep.subr.mxu0 0.0
        %271 = vmatpush1.msra.mxu0 0.0
        %272 = vmatprep.subr.mxu0 0.0
        %273 = vmatpush1.msra.mxu0 0.0
        %274 = vmatprep.subr.mxu0 0.0
        %275 = vmatpush1.msra.mxu0 0.0
        %276 = vmatprep.subr.mxu0 0.0
        %277 = vmatpush1.msra.mxu0 0.0
        %278 = vmatprep.subr.mxu0 0.0
        %279 = vmatpush1.msra.mxu0 0.0
        %280 = vmatprep.subr.mxu0 0.0
        %281 = vmatpush1.msra.mxu0 0.0
        %282 = vmatprep.subr.mxu0 0.0
        %283 = vmatpush1.msra.mxu0 0.0
        %284 = vmatprep.subr.mxu0 0.0
        %285 = vmatpush1.msra.mxu0 0.0
        %286 = vmatprep.subr.mxu0 0.0
        %287 = vmatpush1.msra.mxu0 0.0
        %288 = vmatprep.subr.mxu0 0.0
        %289 = vmatpush1.msra.mxu0 0.0
        %290 = vmatprep.subr.mxu0 0.0
        %291 = vmatpush1.msra.mxu0 0.0
        %292 = vmatprep.subr.mxu0 0.0
        %293 = vmatpush1.msra.mxu0 0.0
        %294 = vmatprep.mubr.f32.mxu0 0.0
        %295 = vmatmul.mubr.f32.gmra.mrb[0].mxu0 %v228
        %v296 = vpop.f32.mrb[0].mxu0
        %v297 = vadd.f32 %v224, %v296
        %v298 = vpop.f32.mrb[0].mxu0
        %299 = vdwg.mxu0
        %300 = vxpose.xlu0.b32.start [1/16] %v297, 128
        %301 = vxpose.xlu0.b32.cont [2/16] 0.0, 128
        %302 = vxpose.xlu0.b32.cont [3/16] 0.0, 128
        %303 = vxpose.xlu0.b32.cont [4/16] 0.0, 128
        %304 = vxpose.xlu0.b32.cont [5/16] 0.0, 128
        %305 = vxpose.xlu0.b32.cont [6/16] 0.0, 128
        %306 = vxpose.xlu0.b32.cont [7/16] 0.0, 128
        %307 = vxpose.xlu0.b32.cont [8/16] 0.0, 128
        %308 = vxpose.xlu0.b32.cont [9/16] 0.0, 128
        %309 = vxpose.xlu0.b32.cont [10/16] 0.0, 128
        %310 = vxpose.xlu0.b32.cont [11/16] 0.0, 128
        %311 = vxpose.xlu0.b32.cont [12/16] 0.0, 128
        %312 = vxpose.xlu0.b32.cont [13/16] 0.0, 128
        %313 = vxpose.xlu0.b32.cont [14/16] 0.0, 128
        %314 = vxpose.xlu0.b32.cont [15/16] 0.0, 128
        %315 = vxpose.xlu0.b32.end [16/16] 0.0, 128
        %v316 = vpop.trf.xlu0
        %v317 = vpop.trf.xlu0
        %v318 = vpop.trf.xlu0
        %v319 = vpop.trf.xlu0
        %v320 = vpop.trf.xlu0
        %v321 = vpop.trf.xlu0
        %v322 = vpop.trf.xlu0
        %v323 = vpop.trf.xlu0
        %v324 = vpop.trf.xlu0
        %v325 = vpop.trf.xlu0
        %v326 = vpop.trf.xlu0
        %v327 = vpop.trf.xlu0
        %v328 = vpop.trf.xlu0
        %v329 = vpop.trf.xlu0
        %v330 = vpop.trf.xlu0
        %v331 = vpop.trf.xlu0
        %v333 = vrot.slane %v297, 2
        %vm334 = vcmask 15360
        %v336 = vsel %vm334, %v316, 0
        %v339 = vsel %vm334, %v317, 0
        %v342 = vsel %vm334, %v318, 0
        %v345 = vsel %vm334, %v319, 0
        %v348 = vsel %vm334, %v320, 0
        %v351 = vsel %vm334, %v321, 0
        %v354 = vsel %vm334, %v322, 0
        %v357 = vsel %vm334, %v323, 0
        %v360 = vsel %vm334, %v324, 0
        %v363 = vsel %vm334, %v325, 0
        %v366 = vsel %vm334, %v326, 0
        %v369 = vsel %vm334, %v327, 0
        %v372 = vsel %vm334, %v328, 0
        %v375 = vsel %vm334, %v329, 0
        %v378 = vsel %vm334, %v330, 0
        %v381 = vsel %vm334, %v331, 0
        %vm383 = vcmask 1041408
        %v384 = vsel %vm383, %v333, 0
        %386 = vmatprep.subr.mxu0 0.0
        %387 = vmatpush1.msra.mxu0 %v384
        %388 = vmatprep.subr.mxu0 0.0
        %389 = vmatpush1.msra.mxu0 0.0
        %390 = vmatprep.subr.mxu0 0.0
        %391 = vmatpush1.msra.mxu0 0.0
        %392 = vmatprep.subr.mxu0 0.0
        %393 = vmatpush1.msra.mxu0 0.0
        %394 = vmatprep.subr.mxu0 0.0
        %395 = vmatpush1.msra.mxu0 0.0
        %396 = vmatprep.subr.mxu0 0.0
        %397 = vmatpush1.msra.mxu0 0.0
        %398 = vmatprep.subr.mxu0 0.0
        %399 = vmatpush1.msra.mxu0 0.0
        %400 = vmatprep.subr.mxu0 0.0
        %401 = vmatpush1.msra.mxu0 0.0
        %402 = vmatprep.subr.mxu0 0.0
        %403 = vmatpush1.msra.mxu0 0.0
        %404 = vmatprep.subr.mxu0 0.0
        %405 = vmatpush1.msra.mxu0 0.0
        %406 = vmatprep.subr.mxu0 0.0
        %407 = vmatpush1.msra.mxu0 0.0
        %408 = vmatprep.subr.mxu0 0.0
        %409 = vmatpush1.msra.mxu0 0.0
        %410 = vmatprep.subr.mxu0 0.0
        %411 = vmatpush1.msra.mxu0 0.0
        %412 = vmatprep.subr.mxu0 0.0
        %413 = vmatpush1.msra.mxu0 0.0
        %414 = vmatprep.subr.mxu0 0.0
        %415 = vmatpush1.msra.mxu0 0.0
        %416 = vmatprep.subr.mxu0 0.0
        %417 = vmatpush1.msra.mxu0 0.0
        %418 = vmatprep.subr.mxu0 0.0
        %419 = vmatpush1.msra.mxu0 0.0
        %420 = vmatprep.subr.mxu0 0.0
        %421 = vmatpush1.msra.mxu0 0.0
        %422 = vmatprep.subr.mxu0 0.0
        %423 = vmatpush1.msra.mxu0 0.0
        %424 = vmatprep.subr.mxu0 0.0
        %425 = vmatpush1.msra.mxu0 0.0
        %426 = vmatprep.subr.mxu0 0.0
        %427 = vmatpush1.msra.mxu0 0.0
        %428 = vmatprep.subr.mxu0 0.0
        %429 = vmatpush1.msra.mxu0 0.0
        %430 = vmatprep.subr.mxu0 0.0
        %431 = vmatpush1.msra.mxu0 0.0
        %432 = vmatprep.subr.mxu0 0.0
        %433 = vmatpush1.msra.mxu0 0.0
        %434 = vmatprep.subr.mxu0 0.0
        %435 = vmatpush1.msra.mxu0 0.0
        %436 = vmatprep.subr.mxu0 0.0
        %437 = vmatpush1.msra.mxu0 0.0
        %438 = vmatprep.subr.mxu0 0.0
        %439 = vmatpush1.msra.mxu0 0.0
        %440 = vmatprep.subr.mxu0 0.0
        %441 = vmatpush1.msra.mxu0 0.0
        %442 = vmatprep.subr.mxu0 0.0
        %443 = vmatpush1.msra.mxu0 0.0
        %444 = vmatprep.subr.mxu0 0.0
        %445 = vmatpush1.msra.mxu0 0.0
        %446 = vmatprep.subr.mxu0 0.0
        %447 = vmatpush1.msra.mxu0 0.0
        %448 = vmatprep.subr.mxu0 0.0
        %449 = vmatpush1.msra.mxu0 0.0
        %450 = vmatprep.mubr.f32.mxu0 0.0
        %451 = vmatmul.mubr.f32.gmra.mrb[0].mxu0 %v336
        %v452 = vpop.f32.mrb[0].mxu0
        %v453 = vadd.f32 0.0, %v452
        %v454 = vpop.f32.mrb[0].mxu0
        %455 = vmatprep.mubr.f32.mxu0 0.0
        %456 = vmatmul.mubr.f32.gmra.mrb[0].mxu0 %v339
        %v457 = vpop.f32.mrb[0].mxu0
        %v458 = vadd.f32 0.0, %v457
        %v459 = vpop.f32.mrb[0].mxu0
        %460 = vmatprep.mubr.f32.mxu0 0.0
        %461 = vmatmul.mubr.f32.gmra.mrb[0].mxu0 %v342
        %v462 = vpop.f32.mrb[0].mxu0
        %v463 = vadd.f32 0.0, %v462
        %v464 = vpop.f32.mrb[0].mxu0
        %465 = vmatprep.mubr.f32.mxu0 0.0
        %466 = vmatmul.mubr.f32.gmra.mrb[0].mxu0 %v345
        %v467 = vpop.f32.mrb[0].mxu0
        %v468 = vadd.f32 0.0, %v467
        %v469 = vpop.f32.mrb[0].mxu0
        %470 = vmatprep.mubr.f32.mxu0 0.0
        %471 = vmatmul.mubr.f32.gmra.mrb[0].mxu0 %v348
        %v472 = vpop.f32.mrb[0].mxu0
        %v473 = vadd.f32 0.0, %v472
        %v474 = vpop.f32.mrb[0].mxu0
        %475 = vmatprep.mubr.f32.mxu0 0.0
        %476 = vmatmul.mubr.f32.gmra.mrb[0].mxu0 %v351
        %v477 = vpop.f32.mrb[0].mxu0
        %v478 = vadd.f32 0.0, %v477
        %v479 = vpop.f32.mrb[0].mxu0
        %480 = vmatprep.mubr.f32.mxu0 0.0
        %481 = vmatmul.mubr.f32.gmra.mrb[0].mxu0 %v354
        %v482 = vpop.f32.mrb[0].mxu0
        %v483 = vadd.f32 0.0, %v482
        %v484 = vpop.f32.mrb[0].mxu0
        %485 = vmatprep.mubr.f32.mxu0 0.0
        %486 = vmatmul.mubr.f32.gmra.mrb[0].mxu0 %v357
        %v487 = vpop.f32.mrb[0].mxu0
        %v488 = vadd.f32 0.0, %v487
        %v489 = vpop.f32.mrb[0].mxu0
        %490 = vmatprep.mubr.f32.mxu0 0.0
        %491 = vmatmul.mubr.f32.gmra.mrb[0].mxu0 %v360
        %v492 = vpop.f32.mrb[0].mxu0
        %v493 = vadd.f32 0.0, %v492
        %v494 = vpop.f32.mrb[0].mxu0
        %495 = vmatprep.mubr.f32.mxu0 0.0
        %496 = vmatmul.mubr.f32.gmra.mrb[0].mxu0 %v363
        %v497 = vpop.f32.mrb[0].mxu0
        %v498 = vadd.f32 0.0, %v497
        %v499 = vpop.f32.mrb[0].mxu0
        %500 = vmatprep.mubr.f32.mxu0 0.0
        %501 = vmatmul.mubr.f32.gmra.mrb[0].mxu0 %v366
        %v502 = vpop.f32.mrb[0].mxu0
        %v503 = vadd.f32 0.0, %v502
        %v504 = vpop.f32.mrb[0].mxu0
        %505 = vmatprep.mubr.f32.mxu0 0.0
        %506 = vmatmul.mubr.f32.gmra.mrb[0].mxu0 %v369
        %v507 = vpop.f32.mrb[0].mxu0
        %v508 = vadd.f32 0.0, %v507
        %v509 = vpop.f32.mrb[0].mxu0
        %510 = vmatprep.mubr.f32.mxu0 0.0
        %511 = vmatmul.mubr.f32.gmra.mrb[0].mxu0 %v372
        %v512 = vpop.f32.mrb[0].mxu0
        %v513 = vadd.f32 0.0, %v512
        %v514 = vpop.f32.mrb[0].mxu0
        %515 = vmatprep.mubr.f32.mxu0 0.0
        %516 = vmatmul.mubr.f32.gmra.mrb[0].mxu0 %v375
        %v517 = vpop.f32.mrb[0].mxu0
        %v518 = vadd.f32 0.0, %v517
        %v519 = vpop.f32.mrb[0].mxu0
        %520 = vmatprep.mubr.f32.mxu0 0.0
        %521 = vmatmul.mubr.f32.gmra.mrb[0].mxu0 %v378
        %v522 = vpop.f32.mrb[0].mxu0
        %v523 = vadd.f32 0.0, %v522
        %v524 = vpop.f32.mrb[0].mxu0
        %525 = vmatprep.mubr.f32.mxu0 0.0
        %526 = vmatmul.mubr.f32.gmra.mrb[0].mxu0 %v381
        %v527 = vpop.f32.mrb[0].mxu0
        %v528 = vadd.f32 0.0, %v527
        %v529 = vpop.f32.mrb[0].mxu0
        %530 = vdwg.mxu0
        %v531 = vlaneseq
        %v532 = vand.u32 %v531, 127
        %vm533 = vcmp.lt.s32.totalorder %v532, 64
        %v534 = vsel %vm533, 1, 0
        %vm535 = vcmp.eq.s32.totalorder %v534, 1
        %v536 = vsel %vm535, %v453, -1e+30
        %v537 = vsel %vm535, %v458, -1e+30
        %v538 = vsel %vm535, %v463, -1e+30
        %v539 = vsel %vm535, %v468, -1e+30
        %v540 = vsel %vm535, %v473, -1e+30
        %v541 = vsel %vm535, %v478, -1e+30
        %v542 = vsel %vm535, %v483, -1e+30
        %v543 = vsel %vm535, %v488, -1e+30
        %v544 = vsel %vm535, %v493, -1e+30
        %v545 = vsel %vm535, %v498, -1e+30
        %v546 = vsel %vm535, %v503, -1e+30
        %v547 = vsel %vm535, %v508, -1e+30
        %v548 = vsel %vm535, %v513, -1e+30
        %v549 = vsel %vm535, %v518, -1e+30
        %v550 = vsel %vm535, %v523, -1e+30
        %v551 = vsel %vm535, %v528, -1e+30
        %552 = vmax.xlane.f32.xlu0 %v536
        %v553 = vpop.xlane.xlu0 %552
        %554 = vmax.xlane.f32.xlu0 %v537
        %v555 = vpop.xlane.xlu0 %554
        %556 = vmax.xlane.f32.xlu0 %v538
        %v557 = vpop.xlane.xlu0 %556
        %558 = vmax.xlane.f32.xlu0 %v539
        %v559 = vpop.xlane.xlu0 %558
        %560 = vmax.xlane.f32.xlu0 %v540
        %v561 = vpop.xlane.xlu0 %560
        %562 = vmax.xlane.f32.xlu0 %v541
        %v563 = vpop.xlane.xlu0 %562
        %564 = vmax.xlane.f32.xlu0 %v542
        %v565 = vpop.xlane.xlu0 %564
        %566 = vmax.xlane.f32.xlu0 %v543
        %v567 = vpop.xlane.xlu0 %566
        %568 = vmax.xlane.f32.xlu0 %v544
        %v569 = vpop.xlane.xlu0 %568
        %570 = vmax.xlane.f32.xlu0 %v545
        %v571 = vpop.xlane.xlu0 %570
        %572 = vmax.xlane.f32.xlu0 %v546
        %v573 = vpop.xlane.xlu0 %572
        %574 = vmax.xlane.f32.xlu0 %v547
        %v575 = vpop.xlane.xlu0 %574
        %576 = vmax.xlane.f32.xlu0 %v548
        %v577 = vpop.xlane.xlu0 %576
        %578 = vmax.xlane.f32.xlu0 %v549
        %v579 = vpop.xlane.xlu0 %578
        %580 = vmax.xlane.f32.xlu0 %v550
        %v581 = vpop.xlane.xlu0 %580
        %582 = vmax.xlane.f32.xlu0 %v551
        %v583 = vpop.xlane.xlu0 %582
        %v584 = vsub.f32 %v536, %v553
        %v585 = vsub.f32 %v537, %v555
        %v586 = vsub.f32 %v538, %v557
        %v587 = vsub.f32 %v539, %v559
        %v588 = vsub.f32 %v540, %v561
        %v589 = vsub.f32 %v541, %v563
        %v590 = vsub.f32 %v542, %v565
        %v591 = vsub.f32 %v543, %v567
        %v592 = vsub.f32 %v544, %v569
        %v593 = vsub.f32 %v545, %v571
        %v594 = vsub.f32 %v546, %v573
        %v595 = vsub.f32 %v547, %v575
        %v596 = vsub.f32 %v548, %v577
        %v597 = vsub.f32 %v549, %v579
        %v598 = vsub.f32 %v550, %v581
        %v599 = vsub.f32 %v551, %v583
        %v600 = vmul.f32 %v584, 1.442695
        %v601 = vpow.pop %v600
        %v602 = vmul.f32 %v585, 1.442695
        %v603 = vpow.pop %v602
        %v604 = vmul.f32 %v586, 1.442695
        %v605 = vpow.pop %v604
        %v606 = vmul.f32 %v587, 1.442695
        %v607 = vpow.pop %v606
        %v608 = vmul.f32 %v588, 1.442695
        %v609 = vpow.pop %v608
        %v610 = vmul.f32 %v589, 1.442695
        %v611 = vpow.pop %v610
        %v612 = vmul.f32 %v590, 1.442695
        %v613 = vpow.pop %v612
        %v614 = vmul.f32 %v591, 1.442695
        %v615 = vpow.pop %v614
        %v616 = vmul.f32 %v592, 1.442695
        %v617 = vpow.pop %v616
        %v618 = vmul.f32 %v593, 1.442695
        %v619 = vpow.pop %v618
        %v620 = vmul.f32 %v594, 1.442695
        %v621 = vpow.pop %v620
        %v622 = vmul.f32 %v595, 1.442695
        %v623 = vpow.pop %v622
        %v624 = vmul.f32 %v596, 1.442695
        %v625 = vpow.pop %v624
        %v626 = vmul.f32 %v597, 1.442695
        %v627 = vpow.pop %v626
        %v628 = vmul.f32 %v598, 1.442695
        %v629 = vpow.pop %v628
        %v630 = vmul.f32 %v599, 1.442695
        %v631 = vpow.pop %v630
        %632 = vadd.xlane.f32.xlu0 %v601
        %v633 = vpop.xlane.xlu0 %632
        %634 = vadd.xlane.f32.xlu0 %v603
        %v635 = vpop.xlane.xlu0 %634
        %636 = vadd.xlane.f32.xlu0 %v605
        %v637 = vpop.xlane.xlu0 %636
        %638 = vadd.xlane.f32.xlu0 %v607
        %v639 = vpop.xlane.xlu0 %638
        %640 = vadd.xlane.f32.xlu0 %v609
        %v641 = vpop.xlane.xlu0 %640
        %642 = vadd.xlane.f32.xlu0 %v611
        %v643 = vpop.xlane.xlu0 %642
        %644 = vadd.xlane.f32.xlu0 %v613
        %v645 = vpop.xlane.xlu0 %644
        %646 = vadd.xlane.f32.xlu0 %v615
        %v647 = vpop.xlane.xlu0 %646
        %648 = vadd.xlane.f32.xlu0 %v617
        %v649 = vpop.xlane.xlu0 %648
        %650 = vadd.xlane.f32.xlu0 %v619
        %v651 = vpop.xlane.xlu0 %650
        %652 = vadd.xlane.f32.xlu0 %v621
        %v653 = vpop.xlane.xlu0 %652
        %654 = vadd.xlane.f32.xlu0 %v623
        %v655 = vpop.xlane.xlu0 %654
        %656 = vadd.xlane.f32.xlu0 %v625
        %v657 = vpop.xlane.xlu0 %656
        %658 = vadd.xlane.f32.xlu0 %v627
        %v659 = vpop.xlane.xlu0 %658
        %660 = vadd.xlane.f32.xlu0 %v629
        %v661 = vpop.xlane.xlu0 %660
        %662 = vadd.xlane.f32.xlu0 %v631
        %v663 = vpop.xlane.xlu0 %662
        %v664 = vrcp.pop %v633
        %v665 = vrcp.pop %v635
        %v666 = vrcp.pop %v637
        %v667 = vrcp.pop %v639
        %v668 = vrcp.pop %v641
        %v669 = vrcp.pop %v643
        %v670 = vrcp.pop %v645
        %v671 = vrcp.pop %v647
        %v672 = vrcp.pop %v649
        %v673 = vrcp.pop %v651
        %v674 = vrcp.pop %v653
        %v675 = vrcp.pop %v655
        %v676 = vrcp.pop %v657
        %v677 = vrcp.pop %v659
        %v678 = vrcp.pop %v661
        %v679 = vrcp.pop %v663
        %v680 = vmul.f32 %v601, %v664
        %v681 = vmul.f32 %v603, %v665
        %v682 = vmul.f32 %v605, %v666
        %v683 = vmul.f32 %v607, %v667
        %v684 = vmul.f32 %v609, %v668
        %v685 = vmul.f32 %v611, %v669
        %v686 = vmul.f32 %v613, %v670
        %v687 = vmul.f32 %v615, %v671
        %v688 = vmul.f32 %v617, %v672
        %v689 = vmul.f32 %v619, %v673
        %v690 = vmul.f32 %v621, %v674
        %v691 = vmul.f32 %v623, %v675
        %v692 = vmul.f32 %v625, %v676
        %v693 = vmul.f32 %v627, %v677
        %v694 = vmul.f32 %v629, %v678
        %v695 = vmul.f32 %v631, %v679
        %696 = vmatprep.subr.mxu0 0.0
        %697 = vmatpush1.xpose.msra.mxu0 %v680
        %698 = vmatprep.subr.mxu0 0.0
        %699 = vmatpush1.xpose.msra.mxu0 %v681
        %700 = vmatprep.subr.mxu0 0.0
        %701 = vmatpush1.xpose.msra.mxu0 %v682
        %702 = vmatprep.subr.mxu0 0.0
        %703 = vmatpush1.xpose.msra.mxu0 %v683
        %704 = vmatprep.subr.mxu0 0.0
        %705 = vmatpush1.xpose.msra.mxu0 %v684
        %706 = vmatprep.subr.mxu0 0.0
        %707 = vmatpush1.xpose.msra.mxu0 %v685
        %708 = vmatprep.subr.mxu0 0.0
        %709 = vmatpush1.xpose.msra.mxu0 %v686
        %710 = vmatprep.subr.mxu0 0.0
        %711 = vmatpush1.xpose.msra.mxu0 %v687
        %712 = vmatprep.subr.mxu0 0.0
        %713 = vmatpush1.xpose.msra.mxu0 %v688
        %714 = vmatprep.subr.mxu0 0.0
        %715 = vmatpush1.xpose.msra.mxu0 %v689
        %716 = vmatprep.subr.mxu0 0.0
        %717 = vmatpush1.xpose.msra.mxu0 %v690
        %718 = vmatprep.subr.mxu0 0.0
        %719 = vmatpush1.xpose.msra.mxu0 %v691
        %720 = vmatprep.subr.mxu0 0.0
        %721 = vmatpush1.xpose.msra.mxu0 %v692
        %722 = vmatprep.subr.mxu0 0.0
        %723 = vmatpush1.xpose.msra.mxu0 %v693
        %724 = vmatprep.subr.mxu0 0.0
        %725 = vmatpush1.xpose.msra.mxu0 %v694
        %726 = vmatprep.subr.mxu0 0.0
        %727 = vmatpush1.xpose.msra.mxu0 %v695
        %728 = vmatprep.subr.mxu0 0.0
        %729 = vmatpush1.xpose.msra.mxu0 0.0
        %730 = vmatprep.subr.mxu0 0.0
        %731 = vmatpush1.xpose.msra.mxu0 0.0
        %732 = vmatprep.subr.mxu0 0.0
        %733 = vmatpush1.xpose.msra.mxu0 0.0
        %734 = vmatprep.subr.mxu0 0.0
        %735 = vmatpush1.xpose.msra.mxu0 0.0
        %736 = vmatprep.subr.mxu0 0.0
        %737 = vmatpush1.xpose.msra.mxu0 0.0
        %738 = vmatprep.subr.mxu0 0.0
        %739 = vmatpush1.xpose.msra.mxu0 0.0
        %740 = vmatprep.subr.mxu0 0.0
        %741 = vmatpush1.xpose.msra.mxu0 0.0
        %742 = vmatprep.subr.mxu0 0.0
        %743 = vmatpush1.xpose.msra.mxu0 0.0
        %744 = vmatprep.subr.mxu0 0.0
        %745 = vmatpush1.xpose.msra.mxu0 0.0
        %746 = vmatprep.subr.mxu0 0.0
        %747 = vmatpush1.xpose.msra.mxu0 0.0
        %748 = vmatprep.subr.mxu0 0.0
        %749 = vmatpush1.xpose.msra.mxu0 0.0
        %750 = vmatprep.subr.mxu0 0.0
        %751 = vmatpush1.xpose.msra.mxu0 0.0
        %752 = vmatprep.subr.mxu0 0.0
        %753 = vmatpush1.xpose.msra.mxu0 0.0
        %754 = vmatprep.subr.mxu0 0.0
        %755 = vmatpush1.xpose.msra.mxu0 0.0
        %756 = vmatprep.subr.mxu0 0.0
        %757 = vmatpush1.xpose.msra.mxu0 0.0
        %758 = vmatprep.subr.mxu0 0.0
        %759 = vmatpush1.xpose.msra.mxu0 0.0
        %760 = vmatprep.mubr.f32.mxu0 0.0
        %761 = vmatmul.mubr.f32.gmra.mrb[0].mxu0 %v217
        %v762 = vpop.f32.mrb[0].mxu0
        %v763 = vadd.f32 0.0, %v762
        %v764 = vpop.f32.mrb[0].mxu0
        %765 = vmatprep.mubr.f32.mxu0 0.0
        %766 = vmatmul.mubr.f32.gmra.mrb[0].mxu0 %v218
        %v767 = vpop.f32.mrb[0].mxu0
        %v768 = vadd.f32 0.0, %v767
        %v769 = vpop.f32.mrb[0].mxu0
        %770 = vdwg.mxu0
        %s771 = sld [smem:[#allocation2]]
        %v772 = vstv %s771
        %v773 = vmul.f32 %v772, %v763
        %v774 = vmul.f32 %v772, %v768
        %v775 = vadd.f32 %v773, %v217
        %v776 = vadd.f32 %v774, %v218
        %777 = vst [vmem:[%s216] sm:$0xff] %v775
        %778 = vst [vmem:[%s216 + $0x8] sm:$0xff] %v776
        %s779 = sand.u32 %s119, 1
        %s780 = scalar_lea.sflag [#allocation5], %s779
        %s781 = sand.u32 %s119, 1
        %s782 = smul.addr %s781, 16
        %s783 = scalar_lea.vmem [#allocation6], %s782
        // Predicated region
        $region41: #{tpu_custom_call.1} parent=35 // pred_check
          %p784 = pneg %p129
        $region42: #{tpu_custom_call.1} parent=35 // pred_check_branch
          %786 = sbr.rel (%p784) target = $region44
        $region43: #{tpu_custom_call.1} parent=35 // pred_region
          %s788 = ssub.s32 256, 256
          %789 = vsyncadd %s780, %s788
          %s790 = smul.addr %s22, 2
          %s791 = smul.addr %s790, 128
          %s792 = scalar_lea.hbm %s4, %s791
          %s793 = sshll.u32 %s783, 4
          %s794 = int_to_ptr.vmem [resolvable:$true] %s793
          %799 = dma.vmem_to_hbm [thread:$0]  %s794, 256, %s792, %s780, 128, 128, 8
        $region44: #{tpu_custom_call.1} parent=35 // pred_fallthru
          _
      $region36: #{tpu_custom_call.1} parent=5 // pred_fallthru
        _
      %p800 = scmp.le.s32.totalorder 2, %s17
      // Predicated region
      $region45: #{tpu_custom_call.1} parent=5 // pred_check
        %p801 = pneg %p800
      $region46: #{tpu_custom_call.1} parent=5 // pred_check_branch
        %803 = sbr.rel (%p801) target = $region48
      $region47: #{tpu_custom_call.1} parent=5 // pred_region
        %s804 = ssub.s32 %s17, 2
        // Predicated region
        $region49: #{tpu_custom_call.1} parent=47 // pred_check
          %p805 = pneg %p135
        $region50: #{tpu_custom_call.1} parent=47 // pred_check_branch
          %807 = sbr.rel (%p805) target = $region52
        $region51: #{tpu_custom_call.1} parent=47 // pred_region
          %s808 = sand.u32 %s120, 1
          %s809 = scalar_lea.sflag [#allocation5], %s808
          %s810 = sand.u32 %s120, 1
          %s811 = smul.addr %s810, 16
          %s812 = scalar_lea.vmem [#allocation6], %s811
          %813 = dma.done %s809, 256
        $region52: #{tpu_custom_call.1} parent=47 // pred_fallthru
          _
      $region48: #{tpu_custom_call.1} parent=5 // pred_fallthru
        _
    $region6: #{tpu_custom_call.1} parent=1 // loop_footer
      %s21 = sadd.s32 1, %s17
    $region7: #{tpu_custom_call.1} parent=1 // loop_footer_branch
      %16 = sbr.rel target = $region3
    $region8: #{tpu_custom_call.1} parent=1 // loop_exit
      _
    %814 = vsyncpa [#allocation4], 1
    %s815 = scalar_lea.sflag [#allocation4], 1
    %816 = vsyncpa %s815, 1
    %817 = vsyncpa [#allocation5], 1
    %s818 = scalar_lea.sflag [#allocation5], 1
    %819 = vsyncpa %s818, 1

</llo_original>
